<compile_context>
chip_gen: v6e
topology: v6e:2x2x1
jax: 0.10.0
libtpu: 0.0.40
codegen_flags: <defaults>
</compile_context>

<pallas_src>
import math
import functools

import jax
import jax.numpy as jnp
from jax.experimental import pallas as pl
from jax.experimental.pallas import tpu as pltpu


# --------------------------------------------------------------------------
# Helpers
# --------------------------------------------------------------------------
def _pick_tile(dim, candidates):
    for c in candidates:
        if dim % c == 0:
            return c
    return dim


def _vmem_limit_bytes():
    # Generation-aware VMEM budget (~60% of capacity), safe fallback 48 MiB.
    try:
        cap = pltpu.get_tpu_info().vmem_capacity_bytes
        return int(cap * 0.6)
    except Exception:
        return 48 * 1024 * 1024


_VMEM_LIMIT = _vmem_limit_bytes()


# --------------------------------------------------------------------------
# LayerNorm kernel (standalone; used for emb LN and final LN).
# Optional fused per-row scale (padding mask multiply) in the epilogue.
# --------------------------------------------------------------------------
def _layernorm_kernel(x_ref, g_ref, b_ref, *rest, eps, has_scale):
    if has_scale:
        s_ref, o_ref = rest
    else:
        (o_ref,) = rest
    x = x_ref[...].astype(jnp.float32)
    mu = jnp.mean(x, axis=-1, keepdims=True)
    var = jnp.mean(jnp.square(x - mu), axis=-1, keepdims=True)
    y = (x - mu) * jax.lax.rsqrt(var + eps)
    y = y * g_ref[...].astype(jnp.float32) + b_ref[...].astype(jnp.float32)
    if has_scale:
        y = y * s_ref[...].astype(jnp.float32)
    o_ref[...] = y.astype(o_ref.dtype)


def layer_norm(x, gamma, beta, eps=1e-5, row_scale=None, out_dtype=jnp.bfloat16):
    M, D = x.shape
    in_b = jnp.dtype(x.dtype).itemsize
    out_b = jnp.dtype(out_dtype).itemsize
    budget = _VMEM_LIMIT // 3          # leave room for double buffers / params
    TM = None
    for c in (1024, 512, 256, 128, 64, 32, 16, 8):
        if M % c == 0 and c * D * (in_b + out_b) * 2 <= budget:
            TM = c
            break
    if TM is None:
        TM = _pick_tile(M, (64, 32, 16, 8))

    has_scale = row_scale is not None
    in_specs = [pl.BlockSpec((TM, D), lambda i: (i, 0)),
                pl.BlockSpec((1, D), lambda i: (0, 0)),
                pl.BlockSpec((1, D), lambda i: (0, 0))]
    args = [x, gamma, beta]
    if has_scale:
        in_specs.append(pl.BlockSpec((TM, 1), lambda i: (i, 0)))
        args.append(row_scale)

    return pl.pallas_call(
        functools.partial(_layernorm_kernel, eps=eps, has_scale=has_scale),
        out_shape=jax.ShapeDtypeStruct((M, D), out_dtype),
        grid=(M // TM,),
        in_specs=in_specs,
        out_specs=pl.BlockSpec((TM, D), lambda i: (i, 0)),
        compiler_params=pltpu.CompilerParams(
            dimension_semantics=("parallel",),
            vmem_limit_bytes=_VMEM_LIMIT),
    )(*args)


# --------------------------------------------------------------------------
# Per-row LN statistics kernel (mean, rstd) used for LN->GEMM fusion.
# --------------------------------------------------------------------------
def _ln_stats_kernel(x_ref, mu_ref, rstd_ref, *, eps):
    x = x_ref[...].astype(jnp.float32)
    mu = jnp.mean(x, axis=-1, keepdims=True)
    var = jnp.mean(jnp.square(x - mu), axis=-1, keepdims=True)
    mu_ref[...] = mu
    rstd_ref[...] = jax.lax.rsqrt(var + eps)


def ln_stats(x, eps=1e-5):
    M, D = x.shape
    TM = _pick_tile(M, (512, 256, 128, 64, 32, 16, 8))
    return pl.pallas_call(
        functools.partial(_ln_stats_kernel, eps=eps),
        out_shape=(jax.ShapeDtypeStruct((M, 1), jnp.float32),
                   jax.ShapeDtypeStruct((M, 1), jnp.float32)),
        grid=(M // TM,),
        in_specs=[pl.BlockSpec((TM, D), lambda i: (i, 0))],
        out_specs=(pl.BlockSpec((TM, 1), lambda i: (i, 0)),
                   pl.BlockSpec((TM, 1), lambda i: (i, 0))),
        compiler_params=pltpu.CompilerParams(
            dimension_semantics=("parallel",),
            vmem_limit_bytes=_VMEM_LIMIT),
    )(x)


# --------------------------------------------------------------------------
# GEMM kernel: bf16 operands, f32 accumulate, optional fused input-LN
# (normalize + affine applied to the A tile) and fused bias/gelu/residual
# epilogue. Output dtype bf16 (f32 only in scratch/epilogue math).
# --------------------------------------------------------------------------
def _matmul_kernel(a_ref, w_ref, bias_ref, *rest, activation, has_residual, has_ln):
    idx = 0
    if has_ln:
        mu_ref, rstd_ref, g_ref, beta_ref = rest[0:4]
        idx = 4
    if has_residual:
        res_ref = rest[idx]
        idx += 1
    o_ref = rest[idx]
    acc_ref = rest[idx + 1]

    @pl.when(pl.program_id(2) == 0)
    def _():
        acc_ref[...] = jnp.zeros_like(acc_ref)

    a = a_ref[...]
    if has_ln:
        a = (a.astype(jnp.float32) - mu_ref[...]) * rstd_ref[...]
        a = a * g_ref[...].astype(jnp.float32) + beta_ref[...].astype(jnp.float32)
    a = a.astype(jnp.bfloat16)
    acc_ref[...] += jnp.dot(a, w_ref[...].astype(jnp.bfloat16),
                            preferred_element_type=jnp.float32)

    @pl.when(pl.program_id(2) == pl.num_programs(2) - 1)
    def _():
        r = acc_ref[...] + bias_ref[...].astype(jnp.float32)
        if activation == "gelu":
            # exact (erf-based) gelu, matching torch.nn.functional.gelu default
            r = 0.5 * r * (1.0 + jax.lax.erf(r * (1.0 / jnp.sqrt(jnp.float32(2.0)))))
        if has_residual:
            r = r + res_ref[...].astype(jnp.float32)
        o_ref[...] = r.astype(o_ref.dtype)


def linear(x, w, b, activation=None, residual=None, ln=None,
           out_dtype=jnp.bfloat16):
    """y = maybe_gelu(LN?(x) @ w + b) (+ residual).  w is (in, out), bf16."""
    M, K = x.shape
    K2, N = w.shape
    assert K == K2
    b2 = b.reshape(1, N)

    tm = _pick_tile(M, (1024, 512, 256, 128, 64, 32, 16, 8))
    tn = _pick_tile(N, (512, 256, 128))
    tk = _pick_tile(K, (512, 256, 128))
    grid = (M // tm, N // tn, K // tk)

    in_specs = [pl.BlockSpec((tm, tk), lambda i, j, k: (i, k)),
                pl.BlockSpec((tk, tn), lambda i, j, k: (k, j)),
                pl.BlockSpec((1, tn), lambda i, j, k: (0, j))]
    args = [x, w, b2]

    has_ln = ln is not None
    if has_ln:
        mu, rstd, gamma, beta = ln
        in_specs += [pl.BlockSpec((tm, 1), lambda i, j, k: (i, 0)),
                     pl.BlockSpec((tm, 1), lambda i, j, k: (i, 0)),
                     pl.BlockSpec((1, tk), lambda i, j, k: (0, k)),
                     pl.BlockSpec((1, tk), lambda i, j, k: (0, k))]
        args += [mu, rstd, gamma.reshape(1, K), beta.reshape(1, K)]

    has_res = residual is not None
    if has_res:
        in_specs.append(pl.BlockSpec((tm, tn), lambda i, j, k: (i, j)))
        args.append(residual)

    return pl.pallas_call(
        functools.partial(_matmul_kernel, activation=activation,
                          has_residual=has_res, has_ln=has_ln),
        out_shape=jax.ShapeDtypeStruct((M, N), out_dtype),
        grid_spec=pltpu.PrefetchScalarGridSpec(
            num_scalar_prefetch=0,
            grid=grid,
            in_specs=in_specs,
            out_specs=pl.BlockSpec((tm, tn), lambda i, j, k: (i, j)),
            scratch_shapes=[pltpu.VMEM((tm, tn), jnp.float32)]),
        compiler_params=pltpu.CompilerParams(
            dimension_semantics=("parallel", "parallel", "arbitrary"),
            vmem_limit_bytes=_VMEM_LIMIT),
    )(*args)


# --------------------------------------------------------------------------
# Attention kernel: consumes the flat (1, S, 3D) qkv block (no XLA transpose),
# slices per-head Q/K/V on the lane axis with static offsets, applies the
# bf16 rel-pos bias + in-kernel key-padding mask, and writes one lane-dense
# (S, D) output block (heads concatenated on lanes) per batch.
# --------------------------------------------------------------------------
def _attention_kernel(qkv_ref, bias_ref, pad_ref, o_ref, *, H, Hd, D, scale):
    pad_row = pad_ref[0]                                        # (1, S) f32
    pad_bool = pad_row > 0.5

    outs = []
    for h in range(H):
        # static lane-offset slices of the flat qkv block
        q = qkv_ref[0, :, h * Hd:(h + 1) * Hd]                  # (S, Hd) bf16
        k = qkv_ref[0, :, D + h * Hd:D + (h + 1) * Hd]          # (S, Hd) bf16
        v = qkv_ref[0, :, 2 * D + h * Hd:2 * D + (h + 1) * Hd]  # (S, Hd) bf16

        # fold the softmax scale into q (S*Hd mults instead of S*S)
        q = (q.astype(jnp.float32) * scale).astype(jnp.bfloat16)

        # s = q @ k^T  (no explicit transpose materialized)
        s = jax.lax.dot_general(q, k, (((1,), (1,)), ((), ())),
                                preferred_element_type=jnp.float32)   # (S, S)

        bias_h = bias_ref[h].astype(jnp.float32)                      # (S, S)
        bias_h = jnp.where(pad_bool, jnp.float32(-1e9), bias_h)       # masked_fill
        s = s + bias_h

        m = jnp.max(s, axis=-1, keepdims=True)
        p = jnp.exp(s - m)
        l = jnp.sum(p, axis=-1, keepdims=True)

        o = jnp.dot(p.astype(jnp.bfloat16), v,
                    preferred_element_type=jnp.float32)               # (S, Hd)
        o = o * pl.reciprocal(l, approx=True)
        outs.append(o)

    # single lane-dense (S, D) store; heads concatenated along lanes
    o_ref[0] = jnp.concatenate(outs, axis=-1).astype(o_ref.dtype)


def attention(qkv, rel_bias, pad, H, Hd, scale):
    """softmax(q*scale @ k^T + masked rel_bias) @ v per head.

    qkv: (B, S, 3D) bf16 flat projection output;
    rel_bias: (H, S, S) bf16 shared across batch (resident, DMA'd once);
    pad: (B, 1, S) f32 key-padding mask (1.0 = padded).
    """
    # TODO(synk): for long sequences switch to flash-style (B, H, q-tile) tiling
    # with online softmax so per-step VMEM stays O(tq*S) on v7x's 64 MiB VMEM.
    B, S, threeD = qkv.shape
    D = H * Hd
    return pl.pallas_call(
        functools.partial(_attention_kernel, H=H, Hd=Hd, D=D, scale=scale),
        out_shape=jax.ShapeDtypeStruct((B, S, D), jnp.bfloat16),
        grid=(B,),
        in_specs=[pl.BlockSpec((1, S, threeD), lambda b: (b, 0, 0)),
                  pl.BlockSpec((H, S, S), lambda b: (0, 0, 0)),   # grid-invariant
                  pl.BlockSpec((1, 1, S), lambda b: (b, 0, 0))],
        out_specs=pl.BlockSpec((1, S, D), lambda b: (b, 0, 0)),
        compiler_params=pltpu.CompilerParams(
            dimension_semantics=("parallel",),
            vmem_limit_bytes=_VMEM_LIMIT),
    )(qkv, rel_bias, pad)


# --------------------------------------------------------------------------
# Relative position bucket table (host/precompute, same math as the torch code)
# --------------------------------------------------------------------------
def relative_position_bucket(relative_position, num_buckets=32, max_distance=128):
    sign = jnp.sign(relative_position)
    num_buckets //= 2
    n = jnp.abs(relative_position)
    max_exact = num_buckets // 2
    is_small = n < max_exact
    max_bucket_val = num_buckets - 1 - max_exact
    safe_n = jnp.maximum(n, 1).astype(jnp.float32)
    val_if_large = max_exact + jnp.ceil(
        jnp.log(safe_n / max_exact)
        / math.log((max_distance - 1) / max_exact) * max_bucket_val
    ).astype(jnp.int32)
    val_if_large = jnp.minimum(val_if_large, num_buckets - 1)
    ret = jnp.where(is_small, n, val_if_large) * sign
    return ret


def build_rp_bucket(max_seq_len, rel_pos_bins, max_rel_pos):
    ctx = jnp.arange(max_seq_len, dtype=jnp.int32)[:, None]
    mem = jnp.arange(max_seq_len, dtype=jnp.int32)[None, :]
    rel = mem - ctx
    rp = relative_position_bucket(rel, num_buckets=rel_pos_bins,
                                  max_distance=max_rel_pos)
    rp = rp - rp.min()
    return rp


# --------------------------------------------------------------------------
# Model (glue in plain JAX, hot paths in Pallas kernels above)
# --------------------------------------------------------------------------
def init_params(key, *, layers, D, Fdim, H, rel_pos_bins):
    keys = iter(jax.random.split(key, 4 * layers + 2))

    def dense(shape):
        # Weights stored in bf16 (halves HBM traffic; f32 accumulation in-kernel).
        return (jax.random.normal(next(keys), shape, jnp.float32) * 0.02
                ).astype(jnp.bfloat16)

    def ln(d):
        return (jnp.ones((1, d), jnp.float32), jnp.zeros((1, d), jnp.float32))

    params = {
        "emb_ln": ln(D),
        "final_ln": ln(D),
        "rel_attn_bias": jax.random.normal(next(keys), (rel_pos_bins, H),
                                           jnp.float32) * 0.02,
        "layers": [],
    }
    for _ in range(layers):
        params["layers"].append({
            "attn_ln": ln(D),
            "in_w": dense((D, 3 * D)), "in_b": jnp.zeros((1, 3 * D), jnp.float32),
            "out_w": dense((D, D)), "out_b": jnp.zeros((1, D), jnp.float32),
            "ffn_ln": ln(D),
            "fc1_w": dense((D, Fdim)), "fc1_b": jnp.zeros((1, Fdim), jnp.float32),
            "fc2_w": dense((Fdim, D)), "fc2_b": jnp.zeros((1, D), jnp.float32),
        })
    return params


def encoder_layer(x_flat, rel_bias, pad, lp, B, S, H, scale):
    D = x_flat.shape[1]
    Hd = D // H

    # --- self-attention block (pre-LN); attn_ln fused into the qkv GEMM ---
    mu, rstd = ln_stats(x_flat)
    qkv = linear(x_flat, lp["in_w"], lp["in_b"],
                 ln=(mu, rstd, lp["attn_ln"][0], lp["attn_ln"][1]))   # (B*S, 3D) bf16
    o = attention(qkv.reshape(B, S, 3 * D), rel_bias, pad, H, Hd, scale)  # (B, S, D)
    # residual fused into the out-projection epilogue
    x_flat = linear(o.reshape(B * S, D), lp["out_w"], lp["out_b"],
                    residual=x_flat)

    # --- FFN block (pre-LN); ffn_ln fused into the fc1 GEMM ---
    mu, rstd = ln_stats(x_flat)
    hidden = linear(x_flat, lp["fc1_w"], lp["fc1_b"], activation="gelu",
                    ln=(mu, rstd, lp["ffn_ln"][0], lp["ffn_ln"][1]))
    # residual fused into the fc2 epilogue
    x_flat = linear(hidden, lp["fc2_w"], lp["fc2_b"], residual=x_flat)
    return x_flat


def transformer_encoder_forward(params, emb, padding_mask, rp_bucket, H):
    B, S, D = emb.shape
    Hd = D // H
    assert S <= rp_bucket.shape[0], "sequence length exceeds precomputed rp_bucket"

    if padding_mask is not None:
        row_scale = (1.0 - padding_mask.astype(jnp.float32)).reshape(B * S, 1)
        pad = padding_mask.astype(jnp.float32).reshape(B, 1, S)
    else:
        row_scale = None
        pad = jnp.zeros((B, 1, S), jnp.float32)

    # emb LayerNorm with the padding-mask multiply fused into the epilogue (bf16 out)
    # TODO(synk): emb_dropout / dropout / attention_dropout treated as inference identity.
    x = layer_norm(emb.reshape(B * S, D), *params["emb_ln"],
                   row_scale=row_scale, out_dtype=jnp.bfloat16)

    # relative-position bias: embedding gather kept in plain JAX (glue); stored bf16,
    # shared (H, S, S) tensor consumed batch-invariantly by the attention kernel.
    rpb = params["rel_attn_bias"][rp_bucket[:S, :S]]               # (S, S, H)
    rel_bias = jnp.transpose(rpb, (2, 0, 1)).astype(jnp.bfloat16)  # (H, S, S)

    scale = float(Hd) ** -0.5
    for lp in params["layers"]:
        x = encoder_layer(x, rel_bias, pad, lp, B, S, H, scale)

    x = layer_norm(x, *params["final_ln"], out_dtype=jnp.float32)
    return x.reshape(B, S, D)


# --------------------------------------------------------------------------
if __name__ == "__main__":
    # small config consistent with the module defaults (scaled down)
    B, S, D, H, Fdim, L = 2, 16, 128, 8, 256, 2
    REL_POS_BINS, MAX_REL_POS, MAX_SEQ_LEN = 32, 128, 64

    key = jax.random.PRNGKey(0)
    k_emb, k_param = jax.random.split(key)
    emb = jax.random.normal(k_emb, (B, S, D), jnp.float32)
    padding_mask = jnp.zeros((B, S), jnp.float32).at[1, S - 3:].set(1.0)

    params = init_params(k_param, layers=L, D=D, Fdim=Fdim, H=H,
                         rel_pos_bins=REL_POS_BINS)
    rp_bucket = build_rp_bucket(MAX_SEQ_LEN, REL_POS_BINS, MAX_REL_POS)

    out = transformer_encoder_forward(params, emb, padding_mask, rp_bucket, H)
    out = jax.block_until_ready(out)
    assert out.shape == (B, S, D)
    assert bool(jnp.all(jnp.isfinite(out)))
    print("KERNEL_OK")
</pallas_src>

<mosaic_0001>
module attributes {stable_mosaic.version = 11 : i64} {
  func.func @_layernorm_kernel(%arg0: i32, %arg1: memref<32x128xf32, #tpu.memory_space<vmem>>, %arg2: memref<1x128xf32, #tpu.memory_space<vmem>>, %arg3: memref<1x128xf32, #tpu.memory_space<vmem>>, %arg4: memref<32x1xf32, #tpu.memory_space<vmem>>, %arg5: memref<32x128xbf16, #tpu.memory_space<vmem>>) attributes {dimension_semantics = [#tpu.dimension_semantics<parallel>], iteration_bounds = array<i64: 1>, scalar_prefetch = 0 : i64, scratch_operands = 0 : i64, tpu.core_type = #tpu.core_type<tc>, window_params = [{transform_indices = @transform_0, window_bounds = array<i64: 32, 128>}, {pipeline_mode = #tpu.pipeline_mode<synchronous>, transform_indices = @transform_1, window_bounds = array<i64: 1, 128>}, {pipeline_mode = #tpu.pipeline_mode<synchronous>, transform_indices = @transform_2, window_bounds = array<i64: 1, 128>}, {transform_indices = @transform_3, window_bounds = array<i64: 32, 1>}, {transform_indices = @transform_4, window_bounds = array<i64: 32, 128>}]} {
    %c0 = arith.constant 0 : index
    %c0_0 = arith.constant 0 : index
    %0 = vector.load %arg1[%c0, %c0_0] : memref<32x128xf32, #tpu.memory_space<vmem>>, vector<32x128xf32>
    %cst = arith.constant dense<0.000000e+00> : vector<32xf32>
    %1 = vector.multi_reduction <add>, %0, %cst [1] : vector<32x128xf32> to vector<32xf32>
    %2 = vector.shape_cast %1 : vector<32xf32> to vector<32x1xf32>
    %cst_1 = arith.constant 1.280000e+02 : f32
    %3 = vector.broadcast %cst_1 : f32 to vector<32x1xf32>
    %4 = arith.divf %2, %3 : vector<32x1xf32>
    %5 = vector.broadcast %4 : vector<32x1xf32> to vector<32x128xf32>
    %6 = arith.subf %0, %5 : vector<32x128xf32>
    %7 = arith.mulf %6, %6 : vector<32x128xf32>
    %cst_2 = arith.constant dense<0.000000e+00> : vector<32xf32>
    %8 = vector.multi_reduction <add>, %7, %cst_2 [1] : vector<32x128xf32> to vector<32xf32>
    %9 = vector.shape_cast %8 : vector<32xf32> to vector<32x1xf32>
    %cst_3 = arith.constant 1.280000e+02 : f32
    %10 = vector.broadcast %cst_3 : f32 to vector<32x1xf32>
    %11 = arith.divf %9, %10 : vector<32x1xf32>
    %12 = vector.broadcast %4 : vector<32x1xf32> to vector<32x128xf32>
    %13 = arith.subf %0, %12 : vector<32x128xf32>
    %cst_4 = arith.constant 9.99999974E-6 : f32
    %14 = vector.broadcast %cst_4 : f32 to vector<32x1xf32>
    %15 = arith.addf %11, %14 : vector<32x1xf32>
    %16 = math.rsqrt %15 : vector<32x1xf32>
    %17 = vector.broadcast %16 : vector<32x1xf32> to vector<32x128xf32>
    %18 = arith.mulf %13, %17 : vector<32x128xf32>
    %c0_5 = arith.constant 0 : index
    %c0_6 = arith.constant 0 : index
    %19 = vector.load %arg2[%c0_5, %c0_6] : memref<1x128xf32, #tpu.memory_space<vmem>>, vector<1x128xf32>
    %20 = vector.broadcast %19 : vector<1x128xf32> to vector<32x128xf32>
    %21 = arith.mulf %18, %20 : vector<32x128xf32>
    %c0_7 = arith.constant 0 : index
    %c0_8 = arith.constant 0 : index
    %22 = vector.load %arg3[%c0_7, %c0_8] : memref<1x128xf32, #tpu.memory_space<vmem>>, vector<1x128xf32>
    %23 = vector.broadcast %22 : vector<1x128xf32> to vector<32x128xf32>
    %24 = arith.addf %21, %23 : vector<32x128xf32>
    %c0_9 = arith.constant 0 : index
    %c0_10 = arith.constant 0 : index
    %25 = vector.load %arg4[%c0_9, %c0_10] : memref<32x1xf32, #tpu.memory_space<vmem>>, vector<32x1xf32>
    %26 = vector.broadcast %25 : vector<32x1xf32> to vector<32x128xf32>
    %27 = arith.mulf %24, %26 : vector<32x128xf32>
    %28 = arith.truncf %27 : vector<32x128xf32> to vector<32x128xbf16>
    %c0_11 = arith.constant 0 : index
    %c0_12 = arith.constant 0 : index
    %29 = vector.load %arg5[%c0_11, %c0_12] : memref<32x128xbf16, #tpu.memory_space<vmem>>, vector<32x128xbf16>
    tpu.vector_store %arg5[%c0_11, %c0_12], %28 {strides = array<i32>} : memref<32x128xbf16, #tpu.memory_space<vmem>>, vector<32x128xbf16>,
    return
  }
  func.func @transform_0(%arg0: i32) -> (i32, i32) {
    %c0_i32 = arith.constant 0 : i32
    %c0_i32_0 = arith.constant 0 : i32
    return %arg0, %c0_i32 : i32, i32
  }
  func.func @transform_1(%arg0: i32) -> (i32, i32) {
    %c0_i32 = arith.constant 0 : i32
    %c0_i32_0 = arith.constant 0 : i32
    %c0_i32_1 = arith.constant 0 : i32
    return %c0_i32, %c0_i32_0 : i32, i32
  }
  func.func @transform_2(%arg0: i32) -> (i32, i32) {
    %c0_i32 = arith.constant 0 : i32
    %c0_i32_0 = arith.constant 0 : i32
    %c0_i32_1 = arith.constant 0 : i32
    return %c0_i32, %c0_i32_0 : i32, i32
  }
  func.func @transform_3(%arg0: i32) -> (i32, i32) {
    %c0_i32 = arith.constant 0 : i32
    %c0_i32_0 = arith.constant 0 : i32
    return %arg0, %c0_i32 : i32, i32
  }
  func.func @transform_4(%arg0: i32) -> (i32, i32) {
    %c0_i32 = arith.constant 0 : i32
    %c0_i32_0 = arith.constant 0 : i32
    return %arg0, %c0_i32 : i32, i32
  }
}

</mosaic_0001>

<llo_original>
// kernel: tpu_custom_call.1
$region0: #{tpu_custom_call.1}
  #allocation0 [shape = 'u32[]', space=smem, size = 0x4, offset = 0x4, fixed_abs, tag = 'smem constant byte address 0x4 - core index']
  #allocation1 [shape = 'u32[144,128]{1,0:T(1,128)}', space=vmem, size = 0x12000, scoped, tag = 'internal scratch']
  %s0 = inlined_call_operand.vmem [shape: f32[32,128], index: 0, kind: input, shape index: {}]
  %s1 = inlined_call_operand.vmem [shape: f32[1,128], index: 1, kind: input, shape index: {}]
  %s2 = inlined_call_operand.vmem [shape: f32[1,128], index: 2, kind: input, shape index: {}]
  %s3 = inlined_call_operand.vmem [shape: f32[32,1], index: 3, kind: input, shape index: {}]
  %s4 = inlined_call_operand.hbm [shape: bf16[32,128], index: 4, kind: output, shape index: {}]
  %s5 = sld [smem:[#allocation0]]
  $region26: #{tpu_custom_call.1} parent=0
    _
  %s7 = ssub.s32 1, %s5
  %s8 = scalar_select 0, %s7, %s5
  $region1: #{tpu_custom_call.1} parent=0
    #allocation2 [shape = 'u8[8192]{0}', space=vmem, size = 0x2000, scoped, tag = 'output window, operand 0, single buffered']
    #allocation3 [shape = 's32[1]{0}', space=sflag, size = 0x4, scoped, tag = 'scoped memory for tpu_custom_call.1']
    %9 = vsyncpa [#allocation3], 0
    // Predicated region
    $region2: #{tpu_custom_call.1} parent=1 // pred_check
      _
    $region3: #{tpu_custom_call.1} parent=1 // pred_check_branch
      %11 = sbr.rel (0) target = $region5
    $region4: #{tpu_custom_call.1} parent=1 // pred_region
      _
    $region5: #{tpu_custom_call.1} parent=1 // pred_fallthru
      _
    // Predicated region
    $region6: #{tpu_custom_call.1} parent=1 // pred_check
      _
    $region7: #{tpu_custom_call.1} parent=1 // pred_check_branch
      %13 = sbr.rel (0) target = $region9
    $region8: #{tpu_custom_call.1} parent=1 // pred_region
      _
    $region9: #{tpu_custom_call.1} parent=1 // pred_fallthru
      _
    // Predicated region
    $region10: #{tpu_custom_call.1} parent=1 // pred_check
      _
    $region11: #{tpu_custom_call.1} parent=1 // pred_check_branch
      %15 = sbr.rel (0) target = $region13
    $region12: #{tpu_custom_call.1} parent=1 // pred_region
      _
    $region13: #{tpu_custom_call.1} parent=1 // pred_fallthru
      _
    // Predicated region
    $region14: #{tpu_custom_call.1} parent=1 // pred_check
      _
    $region15: #{tpu_custom_call.1} parent=1 // pred_check_branch
      %17 = sbr.rel (0) target = $region17
    $region16: #{tpu_custom_call.1} parent=1 // pred_region
      _
    $region17: #{tpu_custom_call.1} parent=1 // pred_fallthru
      _
    %v18 = vld [vmem:[%s0] sm:$0xff]
    %v19 = vld [vmem:[%s0 + $0x8] sm:$0xff]
    %v20 = vld [vmem:[%s0 + $0x10] sm:$0xff]
    %v21 = vld [vmem:[%s0 + $0x18] sm:$0xff]
    %22 = vadd.xlane.f32.xlu0 %v18
    %v23 = vpop.xlane.xlu0 %22
    %24 = vadd.xlane.f32.xlu0 %v19
    %v25 = vpop.xlane.xlu0 %24
    %26 = vadd.xlane.f32.xlu0 %v20
    %v27 = vpop.xlane.xlu0 %26
    %28 = vadd.xlane.f32.xlu0 %v21
    %v29 = vpop.xlane.xlu0 %28
    %v30 = vrcp.pop 128.0
    %v31 = vmul.f32 %v23, %v30
    %v32 = vmul.f32 %v25, %v30
    %v33 = vmul.f32 %v27, %v30
    %v34 = vmul.f32 %v29, %v30
    %v35 = vsub.f32 %v18, %v31
    %v36 = vsub.f32 %v19, %v32
    %v37 = vsub.f32 %v20, %v33
    %v38 = vsub.f32 %v21, %v34
    %v39 = vmul.f32 %v35, %v35
    %v40 = vmul.f32 %v36, %v36
    %v41 = vmul.f32 %v37, %v37
    %v42 = vmul.f32 %v38, %v38
    %43 = vadd.xlane.f32.xlu0 %v39
    %v44 = vpop.xlane.xlu0 %43
    %45 = vadd.xlane.f32.xlu0 %v40
    %v46 = vpop.xlane.xlu0 %45
    %47 = vadd.xlane.f32.xlu0 %v41
    %v48 = vpop.xlane.xlu0 %47
    %49 = vadd.xlane.f32.xlu0 %v42
    %v50 = vpop.xlane.xlu0 %49
    %v51 = vmul.f32 %v44, %v30
    %v52 = vmul.f32 %v46, %v30
    %v53 = vmul.f32 %v48, %v30
    %v54 = vmul.f32 %v50, %v30
    %v55 = vadd.f32 %v51, 1e-05
    %v56 = vadd.f32 %v52, 1e-05
    %v57 = vadd.f32 %v53, 1e-05
    %v58 = vadd.f32 %v54, 1e-05
    %v59 = vrsqrt.pop %v55
    %v60 = vrsqrt.pop %v56
    %v61 = vrsqrt.pop %v57
    %v62 = vrsqrt.pop %v58
    %v63 = vmul.f32 %v35, %v59
    %v64 = vmul.f32 %v36, %v60
    %v65 = vmul.f32 %v37, %v61
    %v66 = vmul.f32 %v38, %v62
    %v67 = vld [vmem:[%s1] sm:$0x1]
    %v69 = vlaneseq
    %v70 = vshrl.u32 %v69, 7
    %v71 = vsub.s32 0, %v70
    %v72 = vrot.slane %v67, %v71
    %v74 = vmul.f32 %v63, %v72
    %v75 = vmul.f32 %v64, %v72
    %v76 = vmul.f32 %v65, %v72
    %v77 = vmul.f32 %v66, %v72
    %v78 = vld [vmem:[%s2] sm:$0x1]
    %v80 = vlaneseq
    %v81 = vshrl.u32 %v80, 7
    %v82 = vsub.s32 0, %v81
    %v83 = vrot.slane %v78, %v82
    %v85 = vadd.f32 %v74, %v83
    %v86 = vadd.f32 %v75, %v83
    %v87 = vadd.f32 %v76, %v83
    %v88 = vadd.f32 %v77, %v83
    %v89 = vld [vmem:[%s3] sm:$0xff]
    %v90 = vld [vmem:[%s3 + $0x8] sm:$0xff]
    %v91 = vld [vmem:[%s3 + $0x10] sm:$0xff]
    %v92 = vld [vmem:[%s3 + $0x18] sm:$0xff]
    %94 = vset.pattern.permute.xlu0 0
    %95 = vperm.xlu0 %94, %v89
    %v96 = vpop.permute.xlu0 %95
    %99 = vset.pattern.permute.xlu0 0
    %100 = vperm.xlu0 %99, %v90
    %v101 = vpop.permute.xlu0 %100
    %104 = vset.pattern.permute.xlu0 0
    %105 = vperm.xlu0 %104, %v91
    %v106 = vpop.permute.xlu0 %105
    %109 = vset.pattern.permute.xlu0 0
    %110 = vperm.xlu0 %109, %v92
    %v111 = vpop.permute.xlu0 %110
    %v113 = vmul.f32 %v85, %v96
    %v114 = vmul.f32 %v86, %v101
    %v115 = vmul.f32 %v87, %v106
    %v116 = vmul.f32 %v88, %v111
    %v117 = vpack.c.bf16 %v114, %v113
    %v118 = vpack.c.bf16 %v116, %v115
    %v121 = vunpack.c.l.b16 %v117
    %v122 = vunpack.c.h.b16 %v117
    %v123 = vunpack.c.l.b16 %v118
    %v124 = vunpack.c.h.b16 %v118
    %v125 = vpack.c.b16 %v121, %v121
    %v126 = vpack.c.b16 %v122, %v122
    %v127 = vpack.c.b16 %v123, %v123
    %v128 = vpack.c.b16 %v124, %v124
    %133 = vst [vmem:[#allocation2] sm:$0xf] %v125
    %134 = vst [vmem:[#allocation2 + $0x4] sm:$0xf] %v126
    %135 = vst [vmem:[#allocation2 + $0x8] sm:$0xf] %v127
    %136 = vst [vmem:[#allocation2 + $0xc] sm:$0xf] %v128
    // Predicated region
    $region18: #{tpu_custom_call.1} parent=1 // pred_check
      _
    $region19: #{tpu_custom_call.1} parent=1 // pred_check_branch
      %138 = sbr.rel (0) target = $region21
    $region20: #{tpu_custom_call.1} parent=1 // pred_region
      %s140 = ssub.s32 256, 256
      %141 = vsyncadd [#allocation3], %s140
      %s142 = sshll.u32 [#allocation2], 4
      %s143 = int_to_ptr.vmem [resolvable:$true] %s142
      %148 = dma.vmem_to_hbm [thread:$0]  %s143, 256, %s4, [#allocation3], 64, 64, 4
    $region21: #{tpu_custom_call.1} parent=1 // pred_fallthru
      _
    // Predicated region
    $region22: #{tpu_custom_call.1} parent=1 // pred_check
      _
    $region23: #{tpu_custom_call.1} parent=1 // pred_check_branch
      %150 = sbr.rel (0) target = $region25
    $region24: #{tpu_custom_call.1} parent=1 // pred_region
      %151 = dma.done [#allocation3], 256
    $region25: #{tpu_custom_call.1} parent=1 // pred_fallthru
      _
    %152 = vsyncpa [#allocation3], 1

</llo_original>
